<compile_context>
chip_gen: v6e
topology: v6e:2x2x1
jax: 0.10.0
libtpu: 0.0.40
codegen_flags: <defaults>
</compile_context>

<pallas_src>
import functools

import jax
import jax.numpy as jnp
from jax.experimental import pallas as pl
from jax.experimental.pallas import tpu as pltpu


def _mlp_kernel(x_ref, w1_ref, b1_ref, w2_ref, b2_ref, o_ref):
    # (tb, 24) @ (24, 256) -> f32 accumulator on the MXU
    h = jnp.dot(x_ref[...], w1_ref[...], preferred_element_type=jnp.float32)
    h = jnp.maximum(h + b1_ref[...], 0.0)                     # bias + ReLU in f32
    # (tb, 256) @ (256, 8) -> (tb, 8); narrow lane-count store (masked vst) is
    # fine here: the kernel is HBM/overhead bound, not store-slot bound.
    o = jnp.dot(h, w2_ref[...], preferred_element_type=jnp.float32)
    o_ref[...] = (o + b2_ref[...]).astype(o_ref.dtype)


def _round_up(n, m):
    return ((n + m - 1) // m) * m


def _choose_batch_tile(B, block_b):
    """Batch tile: full block if tiny, >=2 grid steps otherwise (v7x 2 TCs)."""
    if B <= 8:
        return B                      # full-extent block (allowed for any B)
    if B <= 2 * block_b:
        return _round_up(-(-B // 2), 8)   # ceil(B/2) rounded up to sublane mult
    return block_b


def prepare_params(w1, b1, w2, b2):
    """One-time parameter prep (run once, reuse across forward calls).

    Weights are stored transposed vs. PyTorch: W1:(in, hidden), W2:(hidden, classes).
    Pads the class dim of W2/b2 with zeros to 8 lanes (exact) and fixes dtypes.
    Returns (w1, b1, w2_padded, b2_padded, num_classes).
    """
    hidden, num_classes = w2.shape
    padded_c = max(_round_up(num_classes, 8), 8)
    w2p = jnp.zeros((hidden, padded_c), jnp.float32).at[:, :num_classes].set(
        w2.astype(jnp.float32))
    b2p = jnp.zeros((1, padded_c), jnp.float32).at[:, :num_classes].set(
        b2.reshape(1, -1).astype(jnp.float32))
    w1p = w1.astype(jnp.float32)
    b1p = b1.reshape(1, -1).astype(jnp.float32)
    return w1p, b1p, w2p, b2p, num_classes


@functools.partial(jax.jit, static_argnames=("num_classes", "block_b"))
def neural_net_forward(x, w1, b1, w2p, b2p, *, num_classes, block_b=1024):
    """x: (B, input_size) f32 -> (B, num_classes) f32.

    Expects parameters already processed by prepare_params().
    """
    B, in_dim = x.shape
    hidden = w1.shape[1]
    padded_c = w2p.shape[1]

    tb = _choose_batch_tile(B, block_b)
    grid = (pl.cdiv(B, tb),)

    out = pl.pallas_call(
        _mlp_kernel,
        out_shape=jax.ShapeDtypeStruct((B, padded_c), jnp.float32),
        grid_spec=pltpu.PrefetchScalarGridSpec(
            num_scalar_prefetch=0,
            grid=grid,
            in_specs=[
                # batch-tiled activations (default double-buffered pipeline)
                pl.BlockSpec((tb, in_dim), lambda i: (i, 0)),
                # grid-invariant params: fetched once, single buffer
                pl.BlockSpec((in_dim, hidden), lambda i: (0, 0),
                             pipeline_mode=pl.Buffered(1)),
                pl.BlockSpec((1, hidden), lambda i: (0, 0),
                             pipeline_mode=pl.Buffered(1)),
                pl.BlockSpec((hidden, padded_c), lambda i: (0, 0),
                             pipeline_mode=pl.Buffered(1)),
                pl.BlockSpec((1, padded_c), lambda i: (0, 0),
                             pipeline_mode=pl.Buffered(1)),
            ],
            out_specs=pl.BlockSpec((tb, padded_c), lambda i: (i, 0)),
        ),
        compiler_params=pltpu.CompilerParams(
            dimension_semantics=("parallel",),
        ),
    )(x, w1, b1, w2p, b2p)

    # Strip the zero-padded class lanes (exact; tiny slice, fused in the jit).
    return out[:, :num_classes]


def init_params(key, input_size=24, hidden_size=256, num_classes=2):
    """nn.Linear-style init (uniform +/- 1/sqrt(fan_in)); weights stored (fan_in, fan_out)."""
    k1, k2, k3, k4 = jax.random.split(key, 4)
    bound1 = 1.0 / (input_size ** 0.5)
    bound2 = 1.0 / (hidden_size ** 0.5)
    w1 = jax.random.uniform(k1, (input_size, hidden_size), jnp.float32, -bound1, bound1)
    b1 = jax.random.uniform(k2, (1, hidden_size), jnp.float32, -bound1, bound1)
    w2 = jax.random.uniform(k3, (hidden_size, num_classes), jnp.float32, -bound2, bound2)
    b2 = jax.random.uniform(k4, (1, num_classes), jnp.float32, -bound2, bound2)
    return w1, b1, w2, b2


def reference_forward(x, w1, b1, w2, b2):
    h = jnp.maximum(x @ w1 + b1, 0.0)
    return h @ w2 + b2


if __name__ == "__main__":
    key = jax.random.PRNGKey(0)
    kx, kx2, kp = jax.random.split(key, 3)

    input_size, hidden_size, num_classes = 24, 256, 2

    w1, b1, w2, b2 = init_params(kp, input_size, hidden_size, num_classes)
    params = prepare_params(w1, b1, w2, b2)
    w1p, b1p, w2p, b2p, nc = params

    # Case 1: small, aligned batch.
    batch = 16
    x = jax.random.normal(kx, (batch, input_size), jnp.float32)
    out = neural_net_forward(x, w1p, b1p, w2p, b2p, num_classes=nc)
    out = jax.block_until_ready(out)
    ref = reference_forward(x, w1, b1, w2, b2)
    assert out.shape == (batch, num_classes)
    assert jnp.allclose(out, ref, atol=2e-2, rtol=2e-2), "mismatch vs reference (B=16)"

    # Case 2: odd batch -> partial last grid block; checks masked boundary writes.
    batch2 = 37
    x2 = jax.random.normal(kx2, (batch2, input_size), jnp.float32)
    out2 = neural_net_forward(x2, w1p, b1p, w2p, b2p, num_classes=nc)
    out2 = jax.block_until_ready(out2)
    ref2 = reference_forward(x2, w1, b1, w2, b2)
    assert out2.shape == (batch2, num_classes)
    assert jnp.allclose(out2, ref2, atol=2e-2, rtol=2e-2), "mismatch vs reference (B=37)"

    print("KERNEL_OK")
</pallas_src>

<mosaic_0001>
module attributes {stable_mosaic.version = 11 : i64} {
  func.func @_mlp_kernel(%arg0: i32, %arg1: memref<8x24xf32, #tpu.memory_space<vmem>>, %arg2: memref<24x256xf32, #tpu.memory_space<vmem>>, %arg3: memref<1x256xf32, #tpu.memory_space<vmem>>, %arg4: memref<256x8xf32, #tpu.memory_space<vmem>>, %arg5: memref<1x8xf32, #tpu.memory_space<vmem>>, %arg6: memref<8x8xf32, #tpu.memory_space<vmem>>) attributes {dimension_semantics = [#tpu.dimension_semantics<parallel>], iteration_bounds = array<i64: 2>, scalar_prefetch = 0 : i64, scratch_operands = 0 : i64, tpu.core_type = #tpu.core_type<tc>, window_params = [{transform_indices = @transform_0, window_bounds = array<i64: 8, 24>}, {pipeline_mode = #tpu.pipeline_mode<synchronous>, transform_indices = @transform_1, window_bounds = array<i64: 24, 256>}, {pipeline_mode = #tpu.pipeline_mode<synchronous>, transform_indices = @transform_2, window_bounds = array<i64: 1, 256>}, {pipeline_mode = #tpu.pipeline_mode<synchronous>, transform_indices = @transform_3, window_bounds = array<i64: 256, 8>}, {pipeline_mode = #tpu.pipeline_mode<synchronous>, transform_indices = @transform_4, window_bounds = array<i64: 1, 8>}, {transform_indices = @transform_5, window_bounds = array<i64: 8, 8>}]} {
    %c0 = arith.constant 0 : index
    %c0_0 = arith.constant 0 : index
    %0 = vector.load %arg1[%c0, %c0_0] : memref<8x24xf32, #tpu.memory_space<vmem>>, vector<8x24xf32>
    %c0_1 = arith.constant 0 : index
    %c0_2 = arith.constant 0 : index
    %1 = vector.load %arg2[%c0_1, %c0_2] : memref<24x256xf32, #tpu.memory_space<vmem>>, vector<24x256xf32>
    %cst = arith.constant dense<0.000000e+00> : vector<8x256xf32>
    %2 = tpu.matmul %0, %1, %cst {dimension_numbers = #tpu.dot_dimension_numbers<[1], [0], [0], [1], [0, 0, 1, 1], [], []>} : vector<8x24xf32>, vector<24x256xf32>, vector<8x256xf32> -> vector<8x256xf32>
    %c0_3 = arith.constant 0 : index
    %c0_4 = arith.constant 0 : index
    %3 = vector.load %arg3[%c0_3, %c0_4] : memref<1x256xf32, #tpu.memory_space<vmem>>, vector<1x256xf32>
    %4 = vector.broadcast %3 : vector<1x256xf32> to vector<8x256xf32>
    %5 = arith.addf %2, %4 : vector<8x256xf32>
    %cst_5 = arith.constant 0.000000e+00 : f32
    %6 = vector.broadcast %cst_5 : f32 to vector<8x256xf32>
    %7 = arith.maximumf %5, %6 : vector<8x256xf32>
    %c0_6 = arith.constant 0 : index
    %c0_7 = arith.constant 0 : index
    %8 = vector.load %arg4[%c0_6, %c0_7] : memref<256x8xf32, #tpu.memory_space<vmem>>, vector<256x8xf32>
    %cst_8 = arith.constant dense<0.000000e+00> : vector<8x8xf32>
    %9 = tpu.matmul %7, %8, %cst_8 {dimension_numbers = #tpu.dot_dimension_numbers<[1], [0], [0], [1], [0, 0, 1, 1], [], []>} : vector<8x256xf32>, vector<256x8xf32>, vector<8x8xf32> -> vector<8x8xf32>
    %c0_9 = arith.constant 0 : index
    %c0_10 = arith.constant 0 : index
    %10 = vector.load %arg5[%c0_9, %c0_10] : memref<1x8xf32, #tpu.memory_space<vmem>>, vector<1x8xf32>
    %11 = vector.broadcast %10 : vector<1x8xf32> to vector<8x8xf32>
    %12 = arith.addf %9, %11 : vector<8x8xf32>
    %c0_11 = arith.constant 0 : index
    %c0_12 = arith.constant 0 : index
    %13 = vector.load %arg6[%c0_11, %c0_12] : memref<8x8xf32, #tpu.memory_space<vmem>>, vector<8x8xf32>
    tpu.vector_store %arg6[%c0_11, %c0_12], %12 {strides = array<i32>} : memref<8x8xf32, #tpu.memory_space<vmem>>, vector<8x8xf32>,
    return
  }
  func.func @transform_0(%arg0: i32) -> (i32, i32) {
    %c0_i32 = arith.constant 0 : i32
    %c0_i32_0 = arith.constant 0 : i32
    return %arg0, %c0_i32 : i32, i32
  }
  func.func @transform_1(%arg0: i32) -> (i32, i32) {
    %c0_i32 = arith.constant 0 : i32
    %c0_i32_0 = arith.constant 0 : i32
    %c0_i32_1 = arith.constant 0 : i32
    return %c0_i32, %c0_i32_0 : i32, i32
  }
  func.func @transform_2(%arg0: i32) -> (i32, i32) {
    %c0_i32 = arith.constant 0 : i32
    %c0_i32_0 = arith.constant 0 : i32
    %c0_i32_1 = arith.constant 0 : i32
    return %c0_i32, %c0_i32_0 : i32, i32
  }
  func.func @transform_3(%arg0: i32) -> (i32, i32) {
    %c0_i32 = arith.constant 0 : i32
    %c0_i32_0 = arith.constant 0 : i32
    %c0_i32_1 = arith.constant 0 : i32
    return %c0_i32, %c0_i32_0 : i32, i32
  }
  func.func @transform_4(%arg0: i32) -> (i32, i32) {
    %c0_i32 = arith.constant 0 : i32
    %c0_i32_0 = arith.constant 0 : i32
    %c0_i32_1 = arith.constant 0 : i32
    return %c0_i32, %c0_i32_0 : i32, i32
  }
  func.func @transform_5(%arg0: i32) -> (i32, i32) {
    %c0_i32 = arith.constant 0 : i32
    %c0_i32_0 = arith.constant 0 : i32
    return %arg0, %c0_i32 : i32, i32
  }
}

</mosaic_0001>

<llo_original>
// kernel: neural_net_forward.1
$region0: #{neural_net_forward.1}
  #allocation0 [shape = 'u32[]', space=smem, size = 0x4, offset = 0x4, fixed_abs, tag = 'smem constant byte address 0x4 - core index']
  #allocation1 [shape = 'u32[144,128]{1,0:T(1,128)}', space=vmem, size = 0x12000, scoped, tag = 'internal scratch']
  %s0 = inlined_call_operand.vmem [shape: f32[16,24], index: 0, kind: input, shape index: {}]
  %s1 = inlined_call_operand.vmem [shape: f32[24,256], index: 1, kind: input, shape index: {}]
  %s2 = inlined_call_operand.vmem [shape: f32[1,256], index: 2, kind: input, shape index: {}]
  %s3 = inlined_call_operand.vmem [shape: f32[256,8], index: 3, kind: input, shape index: {}]
  %s4 = inlined_call_operand.vmem [shape: f32[1,8], index: 4, kind: input, shape index: {}]
  %s5 = inlined_call_operand.vmem [shape: f32[16,8], index: 5, kind: output, shape index: {}]
  %s6 = sld [smem:[#allocation0]]
  $region53: #{neural_net_forward.1} parent=0
    _
  %s8 = ssub.s32 1, %s6
  %s9 = scalar_select 0, %s8, %s6
  loop: start=0, step=1, limit=4
  $region2: #{neural_net_forward.1} parent=0 // loop_pre_header
    _
  $region3: #{neural_net_forward.1} parent=0 // loop_header
    %s11 = sphi 0, %s15
    %p12 = scmp.ge.s32.totalorder %s11, 4
    %s21 = sphi 0, %s23
    %s24 = sphi 0, %s21
    %s25 = sphi 0, %s24
    %s41 = sphi 0, %s25
    %s45 = sphi 0, %s45
    %s47 = sphi 0, %s45
    %s48 = sphi 0, %s47
    %s62 = sphi 0, %s48
    %s66 = sphi 0, %s66
    %s68 = sphi 0, %s66
    %s69 = sphi 0, %s68
    %s83 = sphi 0, %s69
    %s87 = sphi 0, %s87
    %s89 = sphi 0, %s87
    %s90 = sphi 0, %s89
    %s104 = sphi 0, %s90
    %s108 = sphi 0, %s108
    %s110 = sphi 0, %s108
    %s111 = sphi 0, %s110
    %s125 = sphi 0, %s111
    %s131 = sphi 0, %s133
    %s134 = sphi 0, %s131
    %s135 = sphi 0, %s134
    %s151 = sphi 0, %s135
  $region4: #{neural_net_forward.1} parent=0 // loop_header_branch
    %14 = sbr.rel (%p12) target = $region8
  $region5: #{neural_net_forward.1} parent=0 // loop_body
    %s16 = ssub.s32 %s11, 1
    %s17 = ssub.s32 %s11, 2
    %s18 = sadd.s32 %s11, 1
    %s19 = ssub.s32 %s11, %s18
    %p20 = scmp.eq.s32.totalorder %s19, 0
    %s22 = sadd.s32 %s21, 1
    %s23 = scalar_select %p20, %s21, %s22
    %p26 = pneg %p20
    %p27 = scmp.eq.s32.totalorder %s11, 1
    %p28 = por %p26, %p27
    %p29 = scmp.ne.s32.totalorder %s21, %s24
    %p30 = scmp.eq.s32.totalorder %s11, 0
    %p31 = por %p29, %p30
    %p32 = scmp.ne.s32.totalorder %s21, %s24
    %p33 = scmp.eq.s32.totalorder %s16, 1
    %p34 = por %p32, %p33
    %p35 = scmp.ne.s32.totalorder %s24, %s25
    %p36 = scmp.eq.s32.totalorder %s16, 0
    %p37 = por %p35, %p36
    %p38 = scmp.ne.s32.totalorder %s24, %s25
    %p39 = scmp.eq.s32.totalorder %s17, 1
    %p40 = por %p38, %p39
    %p42 = scmp.ne.s32.totalorder %s25, %s41
    %p43 = scmp.eq.s32.totalorder %s17, 0
    %p44 = por %p42, %p43
    %s46 = sadd.s32 %s45, 1
    %p49 = scmp.eq.s32.totalorder %s11, 1
    %p50 = scmp.ne.s32.totalorder %s45, %s47
    %p51 = scmp.eq.s32.totalorder %s11, 0
    %p52 = por %p50, %p51
    %p53 = scmp.ne.s32.totalorder %s45, %s47
    %p54 = scmp.eq.s32.totalorder %s16, 1
    %p55 = por %p53, %p54
    %p56 = scmp.ne.s32.totalorder %s47, %s48
    %p57 = scmp.eq.s32.totalorder %s16, 0
    %p58 = por %p56, %p57
    %p59 = scmp.ne.s32.totalorder %s47, %s48
    %p60 = scmp.eq.s32.totalorder %s17, 1
    %p61 = por %p59, %p60
    %p63 = scmp.ne.s32.totalorder %s48, %s62
    %p64 = scmp.eq.s32.totalorder %s17, 0
    %p65 = por %p63, %p64
    %s67 = sadd.s32 %s66, 1
    %p70 = scmp.eq.s32.totalorder %s11, 1
    %p71 = scmp.ne.s32.totalorder %s66, %s68
    %p72 = scmp.eq.s32.totalorder %s11, 0
    %p73 = por %p71, %p72
    %p74 = scmp.ne.s32.totalorder %s66, %s68
    %p75 = scmp.eq.s32.totalorder %s16, 1
    %p76 = por %p74, %p75
    %p77 = scmp.ne.s32.totalorder %s68, %s69
    %p78 = scmp.eq.s32.totalorder %s16, 0
    %p79 = por %p77, %p78
    %p80 = scmp.ne.s32.totalorder %s68, %s69
    %p81 = scmp.eq.s32.totalorder %s17, 1
    %p82 = por %p80, %p81
    %p84 = scmp.ne.s32.totalorder %s69, %s83
    %p85 = scmp.eq.s32.totalorder %s17, 0
    %p86 = por %p84, %p85
    %s88 = sadd.s32 %s87, 1
    %p91 = scmp.eq.s32.totalorder %s11, 1
    %p92 = scmp.ne.s32.totalorder %s87, %s89
    %p93 = scmp.eq.s32.totalorder %s11, 0
    %p94 = por %p92, %p93
    %p95 = scmp.ne.s32.totalorder %s87, %s89
    %p96 = scmp.eq.s32.totalorder %s16, 1
    %p97 = por %p95, %p96
    %p98 = scmp.ne.s32.totalorder %s89, %s90
    %p99 = scmp.eq.s32.totalorder %s16, 0
    %p100 = por %p98, %p99
    %p101 = scmp.ne.s32.totalorder %s89, %s90
    %p102 = scmp.eq.s32.totalorder %s17, 1
    %p103 = por %p101, %p102
    %p105 = scmp.ne.s32.totalorder %s90, %s104
    %p106 = scmp.eq.s32.totalorder %s17, 0
    %p107 = por %p105, %p106
    %s109 = sadd.s32 %s108, 1
    %p112 = scmp.eq.s32.totalorder %s11, 1
    %p113 = scmp.ne.s32.totalorder %s108, %s110
    %p114 = scmp.eq.s32.totalorder %s11, 0
    %p115 = por %p113, %p114
    %p116 = scmp.ne.s32.totalorder %s108, %s110
    %p117 = scmp.eq.s32.totalorder %s16, 1
    %p118 = por %p116, %p117
    %p119 = scmp.ne.s32.totalorder %s110, %s111
    %p120 = scmp.eq.s32.totalorder %s16, 0
    %p121 = por %p119, %p120
    %p122 = scmp.ne.s32.totalorder %s110, %s111
    %p123 = scmp.eq.s32.totalorder %s17, 1
    %p124 = por %p122, %p123
    %p126 = scmp.ne.s32.totalorder %s111, %s125
    %p127 = scmp.eq.s32.totalorder %s17, 0
    %p128 = por %p126, %p127
    %s129 = ssub.s32 %s11, %s18
    %p130 = scmp.eq.s32.totalorder %s129, 0
    %s132 = sadd.s32 %s131, 1
    %s133 = scalar_select %p130, %s131, %s132
    %p136 = pneg %p130
    %p137 = scmp.eq.s32.totalorder %s11, 1
    %p138 = por %p136, %p137
    %p139 = scmp.ne.s32.totalorder %s131, %s134
    %p140 = scmp.eq.s32.totalorder %s11, 0
    %p141 = por %p139, %p140
    %p142 = scmp.ne.s32.totalorder %s131, %s134
    %p143 = scmp.eq.s32.totalorder %s16, 1
    %p144 = por %p142, %p143
    %p145 = scmp.ne.s32.totalorder %s134, %s135
    %p146 = scmp.eq.s32.totalorder %s16, 0
    %p147 = por %p145, %p146
    %p148 = scmp.ne.s32.totalorder %s134, %s135
    %p149 = scmp.eq.s32.totalorder %s17, 1
    %p150 = por %p148, %p149
    %p152 = scmp.ne.s32.totalorder %s135, %s151
    %p153 = scmp.eq.s32.totalorder %s17, 0
    %p154 = por %p152, %p153
    %p155 = scmp.le.s32.totalorder 1, %s11
    %p156 = scmp.lt.s32.totalorder %s11, 3
    %p157 = pnand %p155, %p156
    %p158 = pneg %p157
    // Predicated region
    $region9: #{neural_net_forward.1} parent=5 // pred_check
      _
    $region10: #{neural_net_forward.1} parent=5 // pred_check_branch
      %160 = sbr.rel (%p157) target = $region12
    $region11: #{neural_net_forward.1} parent=5 // pred_region
      %s161 = ssub.s32 %s11, 1
      // Predicated region
      $region13: #{neural_net_forward.1} parent=11 // pred_check
        %p162 = pneg %p58
      $region14: #{neural_net_forward.1} parent=11 // pred_check_branch
        %164 = sbr.rel (%p162) target = $region16
      $region15: #{neural_net_forward.1} parent=11 // pred_region
        _
      $region16: #{neural_net_forward.1} parent=11 // pred_fallthru
        _
      // Predicated region
      $region17: #{neural_net_forward.1} parent=11 // pred_check
        %p165 = pneg %p79
      $region18: #{neural_net_forward.1} parent=11 // pred_check_branch
        %167 = sbr.rel (%p165) target = $region20
      $region19: #{neural_net_forward.1} parent=11 // pred_region
        _
      $region20: #{neural_net_forward.1} parent=11 // pred_fallthru
        _
      // Predicated region
      $region21: #{neural_net_forward.1} parent=11 // pred_check
        %p168 = pneg %p100
      $region22: #{neural_net_forward.1} parent=11 // pred_check_branch
        %170 = sbr.rel (%p168) target = $region24
      $region23: #{neural_net_forward.1} parent=11 // pred_region
        _
      $region24: #{neural_net_forward.1} parent=11 // pred_fallthru
        _
      // Predicated region
      $region25: #{neural_net_forward.1} parent=11 // pred_check
        %p171 = pneg %p121
      $region26: #{neural_net_forward.1} parent=11 // pred_check_branch
        %173 = sbr.rel (%p171) target = $region28
      $region27: #{neural_net_forward.1} parent=11 // pred_region
        _
      $region28: #{neural_net_forward.1} parent=11 // pred_fallthru
        _
    $region12: #{neural_net_forward.1} parent=5 // pred_fallthru
      _
    %p174 = scmp.lt.s32.totalorder %s11, 2
    // Predicated region
    $region29: #{neural_net_forward.1} parent=5 // pred_check
      %p175 = pneg %p174
    $region30: #{neural_net_forward.1} parent=5 // pred_check_branch
      %177 = sbr.rel (%p175) target = $region32
    $region31: #{neural_net_forward.1} parent=5 // pred_region
      // Predicated region
      $region33: #{neural_net_forward.1} parent=31 // pred_check
        %p178 = pneg %p31
      $region34: #{neural_net_forward.1} parent=31 // pred_check_branch
        %180 = sbr.rel (%p178) target = $region36
      $region35: #{neural_net_forward.1} parent=31 // pred_region
        %p181 = scmp.lt.s32.totalorder %s11, 1
        %s182 = scalar_select %p181, %s11, 1
        %s183 = smul.addr %s182, 8
        %s184 = scalar_lea.vmem %s0, %s183
      $region36: #{neural_net_forward.1} parent=31 // pred_fallthru
        _
    $region32: #{neural_net_forward.1} parent=5 // pred_fallthru
      _
    %p185 = scmp.le.s32.totalorder 1, %s11
    %p186 = scmp.lt.s32.totalorder %s11, 3
    %p187 = pnand %p185, %p186
    %p188 = pneg %p187
    // Predicated region
    $region37: #{neural_net_forward.1} parent=5 // pred_check
      _
    $region38: #{neural_net_forward.1} parent=5 // pred_check_branch
      %190 = sbr.rel (%p187) target = $region40
    $region39: #{neural_net_forward.1} parent=5 // pred_region
      %s191 = ssub.s32 %s11, 1
      %p192 = scmp.lt.s32.totalorder %s16, 1
      %s193 = scalar_select %p192, %s16, 1
      %s194 = smul.addr %s193, 8
      %s195 = scalar_lea.vmem %s0, %s194
      %p196 = pneg %p37
      %p197 = pneg %p34
      %p198 = pneg %p58
      %p199 = pneg %p55
      %p200 = pneg %p79
      %p201 = pneg %p76
      %p202 = pneg %p100
      %p203 = pneg %p97
      %p204 = pneg %p121
      %p205 = pneg %p118
      %p206 = pneg %p147
      %p207 = pneg %p144
      %p208 = scmp.lt.s32.totalorder %s16, 1
      %s209 = scalar_select %p208, %s16, 1
      %s210 = smul.addr %s209, 8
      %s211 = scalar_lea.vmem %s5, %s210
      %p212 = scmp.lt.s32.totalorder %s16, 1
      %s213 = scalar_select %p212, %s16, 1
      %s214 = smul.addr %s213, 8
      %s215 = scalar_lea.vmem %s0, %s214
      %p216 = scmp.lt.s32.totalorder %s16, 1
      %s217 = scalar_select %p216, %s16, 1
      %s218 = smul.addr %s217, 8
      %s219 = scalar_lea.vmem %s5, %s218
      %v220 = vld [vmem:[%s215] sm:$0xff]
      %v221 = vld [vmem:[%s1] sm:$0xff]
      %v222 = vld [vmem:[%s1 + $0x8] sm:$0xff]
      %v223 = vld [vmem:[%s1 + $0x10] sm:$0xff]
      %v224 = vld [vmem:[%s1 + $0x18] sm:$0xff]
      %v225 = vld [vmem:[%s1 + $0x20] sm:$0xff]
      %v226 = vld [vmem:[%s1 + $0x28] sm:$0xff]
      %v227 = vld [vmem:[%s2] sm:$0x3]
      %v229 = vlaneseq
      %v230 = vshrl.u32 %v229, 7
      %v231 = vsub.s32 0, %v230
      %v232 = vrot.slane %v227, %v231
      %v233 = vlaneseq
      %v234 = vshrl.u32 %v233, 7
      %v235 = vsub.s32 1, %v234
      %v236 = vrot.slane %v227, %v235
      %vm239 = vcmask 195584
      %v241 = vsel %vm239, %v220, 0
      %243 = vmatprep.subr.mxu0 0.0
      %244 = vmatpush1.msra.mxu0 0.0
      %245 = vmatprep.subr.mxu0 0.0
      %246 = vmatpush1.msra.mxu0 0.0
      %247 = vmatprep.subr.mxu0 0.0
      %248 = vmatpush1.msra.mxu0 0.0
      %249 = vmatprep.subr.mxu0 0.0
      %250 = vmatpush1.msra.mxu0 0.0
      %251 = vmatprep.subr.mxu0 0.0
      %252 = vmatpush1.msra.mxu0 0.0
      %253 = vmatprep.subr.mxu0 0.0
      %254 = vmatpush1.msra.mxu0 0.0
      %255 = vmatprep.subr.mxu0 0.0
      %256 = vmatpush1.msra.mxu0 0.0
      %257 = vmatprep.subr.mxu0 0.0
      %258 = vmatpush1.msra.mxu0 0.0
      %259 = vmatprep.subr.mxu0 0.0
      %260 = vmatpush1.msra.mxu0 0.0
      %261 = vmatprep.subr.mxu0 0.0
      %262 = vmatpush1.msra.mxu0 0.0
      %263 = vmatprep.subr.mxu0 0.0
      %264 = vmatpush1.msra.mxu0 0.0
      %265 = vmatprep.subr.mxu0 0.0
      %266 = vmatpush1.msra.mxu0 0.0
      %267 = vmatprep.subr.mxu0 0.0
      %268 = vmatpush1.msra.mxu0 0.0
      %269 = vmatprep.subr.mxu0 %v226
      %270 = vmatpush1.msra.mxu0 %v225
      %271 = vmatprep.subr.mxu0 %v224
      %272 = vmatpush1.msra.mxu0 %v223
      %273 = vmatprep.subr.mxu0 %v222
      %274 = vmatpush1.msra.mxu0 %v221
      %275 = vmatprep.subr.mxu0 0.0
      %276 = vmatpush2.msra.mxu0 0.0
      %277 = vmatprep.subr.mxu0 0.0
      %278 = vmatpush2.msra.mxu0 0.0
      %279 = vmatprep.subr.mxu0 0.0
      %280 = vmatpush2.msra.mxu0 0.0
      %281 = vmatprep.subr.mxu0 0.0
      %282 = vmatpush2.msra.mxu0 0.0
      %283 = vmatprep.subr.mxu0 0.0
      %284 = vmatpush2.msra.mxu0 0.0
      %285 = vmatprep.subr.mxu0 0.0
      %286 = vmatpush2.msra.mxu0 0.0
      %287 = vmatprep.subr.mxu0 0.0
      %288 = vmatpush2.msra.mxu0 0.0
      %289 = vmatprep.subr.mxu0 0.0
      %290 = vmatpush2.msra.mxu0 0.0
      %291 = vmatprep.subr.mxu0 0.0
      %292 = vmatpush2.msra.mxu0 0.0
      %293 = vmatprep.subr.mxu0 0.0
      %294 = vmatpush2.msra.mxu0 0.0
      %295 = vmatprep.subr.mxu0 0.0
      %296 = vmatpush2.msra.mxu0 0.0
      %297 = vmatprep.subr.mxu0 0.0
      %298 = vmatpush2.msra.mxu0 0.0
      %299 = vmatprep.subr.mxu0 0.0
      %300 = vmatpush2.msra.mxu0 0.0
      %301 = vmatprep.subr.mxu0 0.0
      %302 = vmatpush2.msra.mxu0 0.0
      %303 = vmatprep.subr.mxu0 0.0
      %304 = vmatpush2.msra.mxu0 0.0
      %305 = vmatprep.subr.mxu0 0.0
      %306 = vmatpush2.msra.mxu0 0.0
      %307 = vmatprep.mubr.f32.mxu0 0.0
      %308 = vmatmul.mubr.f32.gmra.mxu0 %v241
      %v309 = vpop.f32.mrf.mxu0
      %v310 = vadd.f32 %v232, %v309
      %v311 = vpop.f32.mrf.mxu0
      %v312 = vadd.f32 %v236, %v311
      %313 = vdwg.mxu0
      %v314 = vmax.f32 %v310, 0.0
      %v315 = vmax.f32 %v312, 0.0
      %v316 = vld [vmem:[%s3] sm:$0xff]
      %v317 = vld [vmem:[%s3 + $0x8] sm:$0xff]
      %v318 = vld [vmem:[%s3 + $0x10] sm:$0xff]
      %v319 = vld [vmem:[%s3 + $0x18] sm:$0xff]
      %v320 = vld [vmem:[%s3 + $0x20] sm:$0xff]
      %v321 = vld [vmem:[%s3 + $0x28] sm:$0xff]
      %v322 = vld [vmem:[%s3 + $0x30] sm:$0xff]
      %v323 = vld [vmem:[%s3 + $0x38] sm:$0xff]
      %v324 = vld [vmem:[%s3 + $0x40] sm:$0xff]
      %v325 = vld [vmem:[%s3 + $0x48] sm:$0xff]
      %v326 = vld [vmem:[%s3 + $0x50] sm:$0xff]
      %v327 = vld [vmem:[%s3 + $0x58] sm:$0xff]
      %v328 = vld [vmem:[%s3 + $0x60] sm:$0xff]
      %v329 = vld [vmem:[%s3 + $0x68] sm:$0xff]
      %v330 = vld [vmem:[%s3 + $0x70] sm:$0xff]
      %v331 = vld [vmem:[%s3 + $0x78] sm:$0xff]
      %v332 = vld [vmem:[%s3 + $0x80] sm:$0xff]
      %v333 = vld [vmem:[%s3 + $0x88] sm:$0xff]
      %v334 = vld [vmem:[%s3 + $0x90] sm:$0xff]
      %v335 = vld [vmem:[%s3 + $0x98] sm:$0xff]
      %v336 = vld [vmem:[%s3 + $0xa0] sm:$0xff]
      %v337 = vld [vmem:[%s3 + $0xa8] sm:$0xff]
      %v338 = vld [vmem:[%s3 + $0xb0] sm:$0xff]
      %v339 = vld [vmem:[%s3 + $0xb8] sm:$0xff]
      %v340 = vld [vmem:[%s3 + $0xc0] sm:$0xff]
      %v341 = vld [vmem:[%s3 + $0xc8] sm:$0xff]
      %v342 = vld [vmem:[%s3 + $0xd0] sm:$0xff]
      %v343 = vld [vmem:[%s3 + $0xd8] sm:$0xff]
      %v344 = vld [vmem:[%s3 + $0xe0] sm:$0xff]
      %v345 = vld [vmem:[%s3 + $0xe8] sm:$0xff]
      %v346 = vld [vmem:[%s3 + $0xf0] sm:$0xff]
      %v347 = vld [vmem:[%s3 + $0xf8] sm:$0xff]
      %v348 = vld [vmem:[%s4] sm:$0x1]
      %v350 = vlaneseq
      %v351 = vshrl.u32 %v350, 7
      %v352 = vsub.s32 0, %v351
      %v353 = vrot.slane %v348, %v352
      %355 = vmatprep.subr.mxu0 0.0
      %356 = vmatpush1.msra.mxu0 %v331
      %357 = vmatprep.subr.mxu0 0.0
      %358 = vmatpush1.msra.mxu0 %v330
      %359 = vmatprep.subr.mxu0 0.0
      %360 = vmatpush1.msra.mxu0 %v329
      %361 = vmatprep.subr.mxu0 0.0
      %362 = vmatpush1.msra.mxu0 %v328
      %363 = vmatprep.subr.mxu0 0.0
      %364 = vmatpush1.msra.mxu0 %v327
      %365 = vmatprep.subr.mxu0 0.0
      %366 = vmatpush1.msra.mxu0 %v326
      %367 = vmatprep.subr.mxu0 0.0
      %368 = vmatpush1.msra.mxu0 %v325
      %369 = vmatprep.subr.mxu0 0.0
      %370 = vmatpush1.msra.mxu0 %v324
      %371 = vmatprep.subr.mxu0 0.0
      %372 = vmatpush1.msra.mxu0 %v323
      %373 = vmatprep.subr.mxu0 0.0
      %374 = vmatpush1.msra.mxu0 %v322
      %375 = vmatprep.subr.mxu0 0.0
      %376 = vmatpush1.msra.mxu0 %v321
      %377 = vmatprep.subr.mxu0 0.0
      %378 = vmatpush1.msra.mxu0 %v320
      %379 = vmatprep.subr.mxu0 0.0
      %380 = vmatpush1.msra.mxu0 %v319
      %381 = vmatprep.subr.mxu0 0.0
      %382 = vmatpush1.msra.mxu0 %v318
      %383 = vmatprep.subr.mxu0 0.0
      %384 = vmatpush1.msra.mxu0 %v317
      %385 = vmatprep.subr.mxu0 0.0
      %386 = vmatpush1.msra.mxu0 %v316
      %387 = vmatprep.subr.mxu0 0.0
      %388 = vmatpush2.msra.mxu0 %v347
      %389 = vmatprep.subr.mxu0 0.0
      %390 = vmatpush2.msra.mxu0 %v346
      %391 = vmatprep.subr.mxu0 0.0
      %392 = vmatpush2.msra.mxu0 %v345
      %393 = vmatprep.subr.mxu0 0.0
      %394 = vmatpush2.msra.mxu0 %v344
      %395 = vmatprep.subr.mxu0 0.0
      %396 = vmatpush2.msra.mxu0 %v343
      %397 = vmatprep.subr.mxu0 0.0
      %398 = vmatpush2.msra.mxu0 %v342
      %399 = vmatprep.subr.mxu0 0.0
      %400 = vmatpush2.msra.mxu0 %v341
      %401 = vmatprep.subr.mxu0 0.0
      %402 = vmatpush2.msra.mxu0 %v340
      %403 = vmatprep.subr.mxu0 0.0
      %404 = vmatpush2.msra.mxu0 %v339
      %405 = vmatprep.subr.mxu0 0.0
      %406 = vmatpush2.msra.mxu0 %v338
      %407 = vmatprep.subr.mxu0 0.0
      %408 = vmatpush2.msra.mxu0 %v337
      %409 = vmatprep.subr.mxu0 0.0
      %410 = vmatpush2.msra.mxu0 %v336
      %411 = vmatprep.subr.mxu0 0.0
      %412 = vmatpush2.msra.mxu0 %v335
      %413 = vmatprep.subr.mxu0 0.0
      %414 = vmatpush2.msra.mxu0 %v334
      %415 = vmatprep.subr.mxu0 0.0
      %416 = vmatpush2.msra.mxu0 %v333
      %417 = vmatprep.subr.mxu0 0.0
      %418 = vmatpush2.msra.mxu0 %v332
      %419 = vmatprep.mubr.f32.mxu0 %v315
      %420 = vmatmul.mubr.f32.gmra.mxu0 %v314
      %v421 = vpop.f32.mrf.mxu0
      %v422 = vadd.f32 %v353, %v421
      %v423 = vpop.f32.mrf.mxu0
      %424 = vdwg.mxu0
      %vm425 = vcmask 64512
      %426 = vst.msk [vmem:[%s219] sm:$0xff] %vm425, %v422
      %p427 = scmp.lt.s32.totalorder %s16, 1
      %s428 = scalar_select %p427, %s16, 1
      %s429 = smul.addr %s428, 8
      %s430 = scalar_lea.vmem %s5, %s429
      // Predicated region
      $region41: #{neural_net_forward.1} parent=39 // pred_check
        %p431 = pneg %p144
      $region42: #{neural_net_forward.1} parent=39 // pred_check_branch
        %433 = sbr.rel (%p431) target = $region44
      $region43: #{neural_net_forward.1} parent=39 // pred_region
        _
      $region44: #{neural_net_forward.1} parent=39 // pred_fallthru
        _
    $region40: #{neural_net_forward.1} parent=5 // pred_fallthru
      _
    %p434 = scmp.le.s32.totalorder 2, %s11
    // Predicated region
    $region45: #{neural_net_forward.1} parent=5 // pred_check
      %p435 = pneg %p434
    $region46: #{neural_net_forward.1} parent=5 // pred_check_branch
      %437 = sbr.rel (%p435) target = $region48
    $region47: #{neural_net_forward.1} parent=5 // pred_region
      %s438 = ssub.s32 %s11, 2
      // Predicated region
      $region49: #{neural_net_forward.1} parent=47 // pred_check
        %p439 = pneg %p150
      $region50: #{neural_net_forward.1} parent=47 // pred_check_branch
        %441 = sbr.rel (%p439) target = $region52
      $region51: #{neural_net_forward.1} parent=47 // pred_region
        %p442 = scmp.lt.s32.totalorder %s17, 1
        %s443 = scalar_select %p442, %s17, 1
        %s444 = smul.addr %s443, 8
        %s445 = scalar_lea.vmem %s5, %s444
      $region52: #{neural_net_forward.1} parent=47 // pred_fallthru
        _
    $region48: #{neural_net_forward.1} parent=5 // pred_fallthru
      _
  $region6: #{neural_net_forward.1} parent=0 // loop_footer
    %s15 = sadd.s32 1, %s11
  $region7: #{neural_net_forward.1} parent=0 // loop_footer_branch
    %10 = sbr.rel target = $region3
  $region8: #{neural_net_forward.1} parent=0 // loop_exit
    _

</llo_original>
